<compile_context>
chip_gen: v5e
topology: v5e:2x2
jax: 0.10.0
libtpu: 0.0.40
codegen_flags: <defaults>
</compile_context>

<pallas_src>
import numpy as np
import jax
import jax.numpy as jnp
from jax import lax
from jax.experimental import pallas as pl
from jax.experimental.pallas import tpu as pltpu


def sobel_mats(window_size=3):
    """Deterministic Sobel filter banks, identical to the PyTorch `sobel()` helper."""
    assert window_size % 2 != 0
    ind = window_size // 2
    matx = np.zeros((window_size, window_size), dtype=np.float64)
    maty = np.zeros((window_size, window_size), dtype=np.float64)
    for jj, j in enumerate(range(-ind, ind + 1)):
        for ii, i in enumerate(range(-ind, ind + 1)):
            denom = float(i * i + j * j)
            matx[jj, ii] = 0.0 if denom == 0.0 else i / denom
            maty[jj, ii] = 0.0 if denom == 0.0 else j / denom
    mult = {3: 2, 5: 20, 7: 780}[window_size]
    return (matx * mult).astype(np.float32), (maty * mult).astype(np.float32)


def _make_sobel_kernel(wx, wy, window_size, padding, tb, H, W):
    """Build a Pallas kernel with the (static) filter taps closed over."""
    K, P = int(window_size), int(padding)
    Hp, Wp = H + 2 * P, W + 2 * P
    Ho, Wo = Hp - K + 1, Wp - K + 1

    # 3x3 Sobel is rank-1 separable; verify against the generated taps.
    separable = (
        K == 3
        and np.allclose(wx, np.outer([1.0, 2.0, 1.0], [-1.0, 0.0, 1.0]))
        and np.allclose(wy, np.outer([-1.0, 0.0, 1.0], [1.0, 2.0, 1.0]))
    )

    def kernel(x_ref, gx_ref, gy_ref, xpad_ref):
        # ---- in-VMEM zero padding (no extra HBM pass) ----------------------
        if P > 0:
            xpad_ref[...] = jnp.zeros((tb, Hp, Wp), jnp.float32)
            xpad_ref[:, P:P + H, P:P + W] = x_ref[...]
        else:
            xpad_ref[...] = x_ref[...]
        xp = xpad_ref[...]                                # (tb, Hp, Wp) f32

        if separable:
            # Horizontal pass over all padded rows (only 3 lane-shifted reads).
            xl = xp[:, :, 0:Wo]
            xc = xp[:, :, 1:1 + Wo]
            xr = xp[:, :, 2:2 + Wo]
            dx = xr - xl                     # [-1, 0, 1]
            sx = xl + 2.0 * xc + xr          # [ 1, 2, 1]
            # Vertical pass (cheap sublane slices).
            gx_ref[...] = dx[:, 0:Ho] + 2.0 * dx[:, 1:1 + Ho] + dx[:, 2:2 + Ho]
            gy_ref[...] = sx[:, 2:2 + Ho] - sx[:, 0:Ho]
        else:
            # General (window 5 / 7) fully-unrolled cross-correlation stencil.
            gx = jnp.zeros((tb, Ho, Wo), jnp.float32)
            gy = jnp.zeros((tb, Ho, Wo), jnp.float32)
            for dj in range(K):
                for di in range(K):
                    wxv = float(wx[dj, di])
                    wyv = float(wy[dj, di])
                    if wxv == 0.0 and wyv == 0.0:
                        continue
                    patch = xp[:, dj:dj + Ho, di:di + Wo]
                    if wxv != 0.0:
                        gx = gx + wxv * patch
                    if wyv != 0.0:
                        gy = gy + wyv * patch
            gx_ref[...] = gx
            gy_ref[...] = gy

    return kernel


def sobel_grad(pred, window_size=3, padding=1):
    """Equivalent of SobelGrad(window_size, padding).forward(pred).

    pred: (B, C, H, W). Returns (gradx, grady), each (B, C, Ho, Wo) float32
    (per-channel Sobel cross-correlation with zero padding).
    """
    B, C, H, W = pred.shape
    K, P = int(window_size), int(padding)
    Hp, Wp = H + 2 * P, W + 2 * P
    Ho, Wo = Hp - K + 1, Wp - K + 1
    wx, wy = sobel_mats(K)

    N = B * C
    x = pred.reshape(N, H, W).astype(jnp.float32)   # free for contiguous f32 input

    # How many channel-images per grid step: bounded by a ~8 MiB VMEM budget
    # (2x input + 2 x 2x output double buffers + 1x padded scratch), capped at 64,
    # and kept small enough that the grid has >= 2 parallel steps when N >= 2
    # (so both TensorCores on v7x get work).
    per_img_bytes = 4 * (2 * H * W + 4 * Ho * Wo + Hp * Wp)
    vmem_budget = 8 * 1024 * 1024
    tb = max(1, min(N, vmem_budget // per_img_bytes, 64))
    tb = max(1, min(tb, pl.cdiv(N, 2)))
    grid = (pl.cdiv(N, tb),)

    kernel = _make_sobel_kernel(wx, wy, K, P, tb, H, W)

    gx, gy = pl.pallas_call(
        kernel,
        out_shape=(
            jax.ShapeDtypeStruct((N, Ho, Wo), jnp.float32),
            jax.ShapeDtypeStruct((N, Ho, Wo), jnp.float32),
        ),
        grid=grid,
        in_specs=[pl.BlockSpec((tb, H, W), lambda i: (i, 0, 0))],
        out_specs=(
            pl.BlockSpec((tb, Ho, Wo), lambda i: (i, 0, 0)),
            pl.BlockSpec((tb, Ho, Wo), lambda i: (i, 0, 0)),
        ),
        scratch_shapes=[pltpu.VMEM((tb, Hp, Wp), jnp.float32)],
        compiler_params=pltpu.CompilerParams(
            dimension_semantics=("parallel",),
            vmem_limit_bytes=32 * 1024 * 1024,
        ),
    )(x)

    return gx.reshape(B, C, Ho, Wo), gy.reshape(B, C, Ho, Wo)


def _reference_sobel_grad(pred, window_size=3, padding=1):
    """Plain-JAX reference (depthwise cross-correlation) for validation."""
    B, C, H, W = pred.shape
    wx, wy = sobel_mats(window_size)
    wx = jnp.broadcast_to(jnp.asarray(wx)[None, None], (C, 1, window_size, window_size))
    wy = jnp.broadcast_to(jnp.asarray(wy)[None, None], (C, 1, window_size, window_size))
    dn = lax.conv_dimension_numbers(pred.shape, wx.shape, ("NCHW", "OIHW", "NCHW"))
    conv = lambda w: lax.conv_general_dilated(
        pred.astype(jnp.float32), w, window_strides=(1, 1),
        padding=[(padding, padding), (padding, padding)],
        dimension_numbers=dn, feature_group_count=C)
    return conv(wx), conv(wy)


if __name__ == "__main__":
    key = jax.random.PRNGKey(0)
    B, C, H, W = 2, 4, 16, 16
    pred = jax.random.normal(key, (B, C, H, W), dtype=jnp.float32)

    gradx, grady = sobel_grad(pred, window_size=3, padding=1)
    jax.block_until_ready((gradx, grady))

    ref_gx, ref_gy = _reference_sobel_grad(pred, window_size=3, padding=1)
    assert gradx.shape == (B, C, H, W) and grady.shape == (B, C, H, W)
    np.testing.assert_allclose(np.asarray(gradx), np.asarray(ref_gx), rtol=1e-5, atol=1e-5)
    np.testing.assert_allclose(np.asarray(grady), np.asarray(ref_gy), rtol=1e-5, atol=1e-5)

    print("KERNEL_OK")
</pallas_src>

<mosaic_0001>
module attributes {stable_mosaic.version = 11 : i64} {
  func.func @kernel(%arg0: i32, %arg1: memref<4x16x16xf32, #tpu.memory_space<vmem>>, %arg2: memref<4x16x16xf32, #tpu.memory_space<vmem>>, %arg3: memref<4x16x16xf32, #tpu.memory_space<vmem>>, %arg4: memref<4x18x18xf32, #tpu.memory_space<vmem>>) attributes {dimension_semantics = [#tpu.dimension_semantics<parallel>], iteration_bounds = array<i64: 2>, scalar_prefetch = 0 : i64, scratch_operands = 1 : i64, tpu.core_type = #tpu.core_type<tc>, window_params = [{transform_indices = @transform_0, window_bounds = array<i64: 4, 16, 16>}, {transform_indices = @transform_1, window_bounds = array<i64: 4, 16, 16>}, {transform_indices = @transform_2, window_bounds = array<i64: 4, 16, 16>}]} {
    %cst = arith.constant 0.000000e+00 : f32
    %0 = vector.broadcast %cst : f32 to vector<4x18x18xf32>
    %c0 = arith.constant 0 : index
    %c0_0 = arith.constant 0 : index
    %c0_1 = arith.constant 0 : index
    %1 = vector.load %arg4[%c0, %c0_0, %c0_1] : memref<4x18x18xf32, #tpu.memory_space<vmem>>, vector<4x18x18xf32>
    tpu.vector_store %arg4[%c0, %c0_0, %c0_1], %0 {strides = array<i32>} : memref<4x18x18xf32, #tpu.memory_space<vmem>>, vector<4x18x18xf32>,
    %c0_2 = arith.constant 0 : index
    %c0_3 = arith.constant 0 : index
    %c0_4 = arith.constant 0 : index
    %2 = vector.load %arg1[%c0_2, %c0_3, %c0_4] : memref<4x16x16xf32, #tpu.memory_space<vmem>>, vector<4x16x16xf32>
    %c0_5 = arith.constant 0 : index
    %c1 = arith.constant 1 : index
    %c1_6 = arith.constant 1 : index
    %3 = vector.load %arg4[%c0_5, %c1, %c1_6] : memref<4x18x18xf32, #tpu.memory_space<vmem>>, vector<4x16x16xf32>
    tpu.vector_store %arg4[%c0_5, %c1, %c1_6], %2 {strides = array<i32>} : memref<4x18x18xf32, #tpu.memory_space<vmem>>, vector<4x16x16xf32>,
    %c0_7 = arith.constant 0 : index
    %c0_8 = arith.constant 0 : index
    %c0_9 = arith.constant 0 : index
    %4 = vector.load %arg4[%c0_7, %c0_8, %c0_9] : memref<4x18x18xf32, #tpu.memory_space<vmem>>, vector<4x18x18xf32>
    %5 = vector.extract_strided_slice %4 {offsets = [0, 0, 0], sizes = [4, 18, 16], strides = [1, 1, 1]} : vector<4x18x18xf32> to vector<4x18x16xf32>
    %6 = vector.extract_strided_slice %4 {offsets = [0, 0, 1], sizes = [4, 18, 16], strides = [1, 1, 1]} : vector<4x18x18xf32> to vector<4x18x16xf32>
    %7 = vector.extract_strided_slice %4 {offsets = [0, 0, 2], sizes = [4, 18, 16], strides = [1, 1, 1]} : vector<4x18x18xf32> to vector<4x18x16xf32>
    %8 = arith.subf %7, %5 : vector<4x18x16xf32>
    %cst_10 = arith.constant 2.000000e+00 : f32
    %9 = vector.broadcast %cst_10 : f32 to vector<4x18x16xf32>
    %10 = arith.mulf %9, %6 : vector<4x18x16xf32>
    %11 = arith.addf %5, %10 : vector<4x18x16xf32>
    %12 = arith.addf %11, %7 : vector<4x18x16xf32>
    %13 = vector.extract_strided_slice %8 {offsets = [0, 0, 0], sizes = [4, 16, 16], strides = [1, 1, 1]} : vector<4x18x16xf32> to vector<4x16x16xf32>
    %14 = vector.extract_strided_slice %8 {offsets = [0, 1, 0], sizes = [4, 16, 16], strides = [1, 1, 1]} : vector<4x18x16xf32> to vector<4x16x16xf32>
    %cst_11 = arith.constant 2.000000e+00 : f32
    %15 = vector.broadcast %cst_11 : f32 to vector<4x16x16xf32>
    %16 = arith.mulf %15, %14 : vector<4x16x16xf32>
    %17 = arith.addf %13, %16 : vector<4x16x16xf32>
    %18 = vector.extract_strided_slice %8 {offsets = [0, 2, 0], sizes = [4, 16, 16], strides = [1, 1, 1]} : vector<4x18x16xf32> to vector<4x16x16xf32>
    %19 = arith.addf %17, %18 : vector<4x16x16xf32>
    %c0_12 = arith.constant 0 : index
    %c0_13 = arith.constant 0 : index
    %c0_14 = arith.constant 0 : index
    %20 = vector.load %arg2[%c0_12, %c0_13, %c0_14] : memref<4x16x16xf32, #tpu.memory_space<vmem>>, vector<4x16x16xf32>
    tpu.vector_store %arg2[%c0_12, %c0_13, %c0_14], %19 {strides = array<i32>} : memref<4x16x16xf32, #tpu.memory_space<vmem>>, vector<4x16x16xf32>,
    %21 = vector.extract_strided_slice %12 {offsets = [0, 2, 0], sizes = [4, 16, 16], strides = [1, 1, 1]} : vector<4x18x16xf32> to vector<4x16x16xf32>
    %22 = vector.extract_strided_slice %12 {offsets = [0, 0, 0], sizes = [4, 16, 16], strides = [1, 1, 1]} : vector<4x18x16xf32> to vector<4x16x16xf32>
    %23 = arith.subf %21, %22 : vector<4x16x16xf32>
    %c0_15 = arith.constant 0 : index
    %c0_16 = arith.constant 0 : index
    %c0_17 = arith.constant 0 : index
    %24 = vector.load %arg3[%c0_15, %c0_16, %c0_17] : memref<4x16x16xf32, #tpu.memory_space<vmem>>, vector<4x16x16xf32>
    tpu.vector_store %arg3[%c0_15, %c0_16, %c0_17], %23 {strides = array<i32>} : memref<4x16x16xf32, #tpu.memory_space<vmem>>, vector<4x16x16xf32>,
    return
  }
  func.func @transform_0(%arg0: i32) -> (i32, i32, i32) {
    %c0_i32 = arith.constant 0 : i32
    %c0_i32_0 = arith.constant 0 : i32
    %c0_i32_1 = arith.constant 0 : i32
    return %arg0, %c0_i32, %c0_i32_0 : i32, i32, i32
  }
  func.func @transform_1(%arg0: i32) -> (i32, i32, i32) {
    %c0_i32 = arith.constant 0 : i32
    %c0_i32_0 = arith.constant 0 : i32
    %c0_i32_1 = arith.constant 0 : i32
    return %arg0, %c0_i32, %c0_i32_0 : i32, i32, i32
  }
  func.func @transform_2(%arg0: i32) -> (i32, i32, i32) {
    %c0_i32 = arith.constant 0 : i32
    %c0_i32_0 = arith.constant 0 : i32
    %c0_i32_1 = arith.constant 0 : i32
    return %arg0, %c0_i32, %c0_i32_0 : i32, i32, i32
  }
}

</mosaic_0001>

<llo_original>
// kernel: tpu_custom_call.1
$region0: #{tpu_custom_call.1}
  #allocation0 [shape = 'u32[]', space=smem, size = 0x4, offset = 0x4, fixed_abs, tag = 'smem constant byte address 0x4 - core index']
  #allocation1 [shape = 'u32[72,128]{1,0:T(1,128)}', space=vmem, size = 0x9000, scoped, tag = 'internal scratch']
  #allocation2 [shape = 'f32[4,18,18]{2,1,0:T(8,128)}', space=vmem, size = 0xc000, scoped, tag = 'scratch operand']
  %s0 = inlined_call_operand.hbm [shape: f32[8,16,16], index: 0, kind: input, shape index: {}]
  %s1 = inlined_call_operand.hbm [shape: f32[8,16,16], index: 1, kind: output, shape index: {0}]
  %s2 = inlined_call_operand.hbm [shape: f32[8,16,16], index: 2, kind: output, shape index: {1}]
  %3 = xla_tuple %s1, %s2
  %s4 = sld [smem:[#allocation0]]
  $region49: #{tpu_custom_call.1} parent=0
    _
  %s6 = ssub.s32 1, %s4
  %s7 = scalar_select 0, %s6, %s4
  $region1: #{tpu_custom_call.1} parent=0
    #allocation3 [shape = 'u8[65536]{0}', space=vmem, size = 0x10000, scoped, tag = 'input window, operand 0']
    #allocation4 [shape = 's32[2]{0}', space=sflag, size = 0x8, scoped, tag = 'scoped memory for tpu_custom_call.1']
    #allocation5 [shape = 's32[2]{0}', space=sflag, size = 0x8, scoped, tag = 'scoped memory for tpu_custom_call.1']
    #allocation6 [shape = 'u8[65536]{0}', space=vmem, size = 0x10000, scoped, tag = 'output window, operand 0']
    #allocation7 [shape = 'u8[65536]{0}', space=vmem, size = 0x10000, scoped, tag = 'output window, operand 1']
    #allocation8 [shape = 's32[2]{0}', space=sflag, size = 0x8, scoped, tag = 'scoped memory for tpu_custom_call.1']
    %8 = vsyncpa [#allocation4], 0
    %s9 = scalar_lea.sflag [#allocation4], 1
    %10 = vsyncpa %s9, 0
    %11 = vsyncpa [#allocation5], 0
    %s12 = scalar_lea.sflag [#allocation5], 1
    %13 = vsyncpa %s12, 0
    %14 = vsyncpa [#allocation8], 0
    %s15 = scalar_lea.sflag [#allocation8], 1
    %16 = vsyncpa %s15, 0
    loop: start=0, step=1, limit=4
    $region2: #{tpu_custom_call.1} parent=1 // loop_pre_header
      _
    $region3: #{tpu_custom_call.1} parent=1 // loop_header
      %s18 = sphi 0, %s22
      %p19 = scmp.ge.s32.totalorder %s18, 4
      %s28 = sphi 0, %s30
      %s31 = sphi 0, %s28
      %s32 = sphi 0, %s31
      %s48 = sphi 0, %s32
      %s54 = sphi 0, %s56
      %s57 = sphi 0, %s54
      %s58 = sphi 0, %s57
      %s74 = sphi 0, %s58
      %s80 = sphi 0, %s82
      %s83 = sphi 0, %s80
      %s84 = sphi 0, %s83
      %s100 = sphi 0, %s84
    $region4: #{tpu_custom_call.1} parent=1 // loop_header_branch
      %21 = sbr.rel (%p19) target = $region8
    $region5: #{tpu_custom_call.1} parent=1 // loop_body
      %s23 = ssub.s32 %s18, 1
      %s24 = ssub.s32 %s18, 2
      %s25 = sadd.s32 %s18, 1
      %s26 = ssub.s32 %s18, %s25
      %p27 = scmp.eq.s32.totalorder %s26, 0
      %s29 = sadd.s32 %s28, 1
      %s30 = scalar_select %p27, %s28, %s29
      %p33 = pneg %p27
      %p34 = scmp.eq.s32.totalorder %s18, 1
      %p35 = por %p33, %p34
      %p36 = scmp.ne.s32.totalorder %s28, %s31
      %p37 = scmp.eq.s32.totalorder %s18, 0
      %p38 = por %p36, %p37
      %p39 = scmp.ne.s32.totalorder %s28, %s31
      %p40 = scmp.eq.s32.totalorder %s23, 1
      %p41 = por %p39, %p40
      %p42 = scmp.ne.s32.totalorder %s31, %s32
      %p43 = scmp.eq.s32.totalorder %s23, 0
      %p44 = por %p42, %p43
      %p45 = scmp.ne.s32.totalorder %s31, %s32
      %p46 = scmp.eq.s32.totalorder %s24, 1
      %p47 = por %p45, %p46
      %p49 = scmp.ne.s32.totalorder %s32, %s48
      %p50 = scmp.eq.s32.totalorder %s24, 0
      %p51 = por %p49, %p50
      %s52 = ssub.s32 %s18, %s25
      %p53 = scmp.eq.s32.totalorder %s52, 0
      %s55 = sadd.s32 %s54, 1
      %s56 = scalar_select %p53, %s54, %s55
      %p59 = pneg %p53
      %p60 = scmp.eq.s32.totalorder %s18, 1
      %p61 = por %p59, %p60
      %p62 = scmp.ne.s32.totalorder %s54, %s57
      %p63 = scmp.eq.s32.totalorder %s18, 0
      %p64 = por %p62, %p63
      %p65 = scmp.ne.s32.totalorder %s54, %s57
      %p66 = scmp.eq.s32.totalorder %s23, 1
      %p67 = por %p65, %p66
      %p68 = scmp.ne.s32.totalorder %s57, %s58
      %p69 = scmp.eq.s32.totalorder %s23, 0
      %p70 = por %p68, %p69
      %p71 = scmp.ne.s32.totalorder %s57, %s58
      %p72 = scmp.eq.s32.totalorder %s24, 1
      %p73 = por %p71, %p72
      %p75 = scmp.ne.s32.totalorder %s58, %s74
      %p76 = scmp.eq.s32.totalorder %s24, 0
      %p77 = por %p75, %p76
      %s78 = ssub.s32 %s18, %s25
      %p79 = scmp.eq.s32.totalorder %s78, 0
      %s81 = sadd.s32 %s80, 1
      %s82 = scalar_select %p79, %s80, %s81
      %p85 = pneg %p79
      %p86 = scmp.eq.s32.totalorder %s18, 1
      %p87 = por %p85, %p86
      %p88 = scmp.ne.s32.totalorder %s80, %s83
      %p89 = scmp.eq.s32.totalorder %s18, 0
      %p90 = por %p88, %p89
      %p91 = scmp.ne.s32.totalorder %s80, %s83
      %p92 = scmp.eq.s32.totalorder %s23, 1
      %p93 = por %p91, %p92
      %p94 = scmp.ne.s32.totalorder %s83, %s84
      %p95 = scmp.eq.s32.totalorder %s23, 0
      %p96 = por %p94, %p95
      %p97 = scmp.ne.s32.totalorder %s83, %s84
      %p98 = scmp.eq.s32.totalorder %s24, 1
      %p99 = por %p97, %p98
      %p101 = scmp.ne.s32.totalorder %s84, %s100
      %p102 = scmp.eq.s32.totalorder %s24, 0
      %p103 = por %p101, %p102
      %p104 = scmp.le.s32.totalorder 1, %s18
      %p105 = scmp.lt.s32.totalorder %s18, 3
      %p106 = pnand %p104, %p105
      %p107 = pneg %p106
      // Predicated region
      $region9: #{tpu_custom_call.1} parent=5 // pred_check
        _
      $region10: #{tpu_custom_call.1} parent=5 // pred_check_branch
        %109 = sbr.rel (%p106) target = $region12
      $region11: #{tpu_custom_call.1} parent=5 // pred_region
        %s110 = ssub.s32 %s18, 1
      $region12: #{tpu_custom_call.1} parent=5 // pred_fallthru
        _
      %p111 = scmp.lt.s32.totalorder %s18, 2
      // Predicated region
      $region13: #{tpu_custom_call.1} parent=5 // pred_check
        %p112 = pneg %p111
      $region14: #{tpu_custom_call.1} parent=5 // pred_check_branch
        %114 = sbr.rel (%p112) target = $region16
      $region15: #{tpu_custom_call.1} parent=5 // pred_region
        // Predicated region
        $region17: #{tpu_custom_call.1} parent=15 // pred_check
          %p115 = pneg %p38
        $region18: #{tpu_custom_call.1} parent=15 // pred_check_branch
          %117 = sbr.rel (%p115) target = $region20
        $region19: #{tpu_custom_call.1} parent=15 // pred_region
          %s118 = sand.u32 %s28, 1
          %s119 = scalar_lea.sflag [#allocation4], %s118
          %s120 = sand.u32 %s28, 1
          %s121 = smul.addr %s120, 64
          %s122 = scalar_lea.vmem [#allocation3], %s121
          %s123 = smul.u32 4, %s18
          %125 = vsyncadd %s119, 0
          %s126 = smul.addr %s123, 2
          %s127 = smul.addr %s126, 8
          %s128 = scalar_lea.hbm %s0, %s127
          %s129 = sshll.u32 %s128, 4
          %s130 = int_to_ptr.hbm [resolvable:$true] %s129
          %s131 = sshll.u32 %s122, 4
          %s132 = int_to_ptr.vmem [resolvable:$true] %s131
          %137 = dma.hbm_to_vmem [thread:$0]  %s130, 1024, %s132, %s119, 128, 128, 8
        $region20: #{tpu_custom_call.1} parent=15 // pred_fallthru
          _
      $region16: #{tpu_custom_call.1} parent=5 // pred_fallthru
        _
      %p138 = scmp.le.s32.totalorder 1, %s18
      %p139 = scmp.lt.s32.totalorder %s18, 3
      %p140 = pnand %p138, %p139
      %p141 = pneg %p140
      // Predicated region
      $region21: #{tpu_custom_call.1} parent=5 // pred_check
        _
      $region22: #{tpu_custom_call.1} parent=5 // pred_check_branch
        %143 = sbr.rel (%p140) target = $region24
      $region23: #{tpu_custom_call.1} parent=5 // pred_region
        %s144 = ssub.s32 %s18, 1
        %s145 = sand.u32 %s31, 1
        %s146 = scalar_lea.sflag [#allocation4], %s145
        %s147 = sand.u32 %s31, 1
        %s148 = smul.addr %s147, 64
        %s149 = scalar_lea.vmem [#allocation3], %s148
        // Predicated region
        $region25: #{tpu_custom_call.1} parent=23 // pred_check
          %p150 = pneg %p44
        $region26: #{tpu_custom_call.1} parent=23 // pred_check_branch
          %152 = sbr.rel (%p150) target = $region28
        $region27: #{tpu_custom_call.1} parent=23 // pred_region
          %154 = dma.done %s146, 1024
        $region28: #{tpu_custom_call.1} parent=23 // pred_fallthru
          _
        %s155 = sand.u32 %s31, 1
        %s156 = scalar_lea.sflag [#allocation4], %s155
        %s157 = sand.u32 %s31, 1
        %s158 = smul.addr %s157, 64
        %s159 = scalar_lea.vmem [#allocation3], %s158
        %p160 = pneg %p44
        %p161 = pneg %p41
        %p162 = pneg %p70
        %p163 = pneg %p67
        %s164 = sand.u32 %s57, 1
        %s165 = scalar_lea.sflag [#allocation5], %s164
        %s166 = sand.u32 %s57, 1
        %s167 = smul.addr %s166, 64
        %s168 = scalar_lea.vmem [#allocation6], %s167
        %p169 = pneg %p96
        %p170 = pneg %p93
        %s171 = sand.u32 %s83, 1
        %s172 = scalar_lea.sflag [#allocation8], %s171
        %s173 = sand.u32 %s83, 1
        %s174 = smul.addr %s173, 64
        %s175 = scalar_lea.vmem [#allocation7], %s174
        %s176 = smul.u32 4, %s23
        %s177 = smul.u32 4, %s23
        %s178 = smul.u32 4, %s23
        %vm179 = vcmask 146432
        %180 = vst.msk [vmem:[#allocation2] sm:$0xff] %vm179, 0.0
        %181 = vst.msk [vmem:[#allocation2 + $0x8] sm:$0xff] %vm179, 0.0
        %vm182 = vcmask 140288
        %183 = vst.msk [vmem:[#allocation2 + $0x10] sm:$0x3] %vm182, 0.0
        %184 = vst.msk [vmem:[#allocation2 + $0x18] sm:$0xff] %vm179, 0.0
        %185 = vst.msk [vmem:[#allocation2 + $0x20] sm:$0xff] %vm179, 0.0
        %186 = vst.msk [vmem:[#allocation2 + $0x28] sm:$0x3] %vm182, 0.0
        %187 = vst.msk [vmem:[#allocation2 + $0x30] sm:$0xff] %vm179, 0.0
        %188 = vst.msk [vmem:[#allocation2 + $0x38] sm:$0xff] %vm179, 0.0
        %189 = vst.msk [vmem:[#allocation2 + $0x40] sm:$0x3] %vm182, 0.0
        %190 = vst.msk [vmem:[#allocation2 + $0x48] sm:$0xff] %vm179, 0.0
        %191 = vst.msk [vmem:[#allocation2 + $0x50] sm:$0xff] %vm179, 0.0
        %192 = vst.msk [vmem:[#allocation2 + $0x58] sm:$0x3] %vm182, 0.0
        %v193 = vld [vmem:[%s149] sm:$0xff]
        %v194 = vld [vmem:[%s149 + $0x8] sm:$0xff]
        %v195 = vld [vmem:[%s149 + $0x10] sm:$0xff]
        %v196 = vld [vmem:[%s149 + $0x18] sm:$0xff]
        %v197 = vld [vmem:[%s149 + $0x20] sm:$0xff]
        %v198 = vld [vmem:[%s149 + $0x28] sm:$0xff]
        %v199 = vld [vmem:[%s149 + $0x30] sm:$0xff]
        %v200 = vld [vmem:[%s149 + $0x38] sm:$0xff]
        %209 = vrot.lane.b32.xlu0 %v193, 1
        %v210 = vpop.permute.xlu0 %209
        %211 = vrot.lane.b32.xlu0 %v194, 1
        %v212 = vpop.permute.xlu0 %211
        %213 = vrot.lane.b32.xlu0 %v195, 1
        %v214 = vpop.permute.xlu0 %213
        %215 = vrot.lane.b32.xlu0 %v196, 1
        %v216 = vpop.permute.xlu0 %215
        %217 = vrot.lane.b32.xlu0 %v197, 1
        %v218 = vpop.permute.xlu0 %217
        %219 = vrot.lane.b32.xlu0 %v198, 1
        %v220 = vpop.permute.xlu0 %219
        %221 = vrot.lane.b32.xlu0 %v199, 1
        %v222 = vpop.permute.xlu0 %221
        %223 = vrot.lane.b32.xlu0 %v200, 1
        %v224 = vpop.permute.xlu0 %223
        %vm233 = vcmask 138248
        %234 = vst.msk [vmem:[#allocation2 + $0x1] sm:$0xff] %vm233, %v210
        %235 = vst.msk [vmem:[#allocation2 + $0x9] sm:$0xff] %vm233, %v212
        %236 = vst.msk [vmem:[#allocation2 + $0x19] sm:$0xff] %vm233, %v214
        %237 = vst.msk [vmem:[#allocation2 + $0x21] sm:$0xff] %vm233, %v216
        %238 = vst.msk [vmem:[#allocation2 + $0x31] sm:$0xff] %vm233, %v218
        %239 = vst.msk [vmem:[#allocation2 + $0x39] sm:$0xff] %vm233, %v220
        %240 = vst.msk [vmem:[#allocation2 + $0x49] sm:$0xff] %vm233, %v222
        %241 = vst.msk [vmem:[#allocation2 + $0x51] sm:$0xff] %vm233, %v224
        %v242 = vld [vmem:[#allocation2] sm:$0xff]
        %v243 = vld [vmem:[#allocation2 + $0x8] sm:$0xff]
        %v244 = vld [vmem:[#allocation2 + $0x10] sm:$0x3]
        %v245 = vld [vmem:[#allocation2 + $0x18] sm:$0xff]
        %v246 = vld [vmem:[#allocation2 + $0x20] sm:$0xff]
        %v247 = vld [vmem:[#allocation2 + $0x28] sm:$0x3]
        %v248 = vld [vmem:[#allocation2 + $0x30] sm:$0xff]
        %v249 = vld [vmem:[#allocation2 + $0x38] sm:$0xff]
        %v250 = vld [vmem:[#allocation2 + $0x40] sm:$0x3]
        %v251 = vld [vmem:[#allocation2 + $0x48] sm:$0xff]
        %v252 = vld [vmem:[#allocation2 + $0x50] sm:$0xff]
        %v253 = vld [vmem:[#allocation2 + $0x58] sm:$0x3]
        %266 = vrot.lane.b32.xlu0 %v242, 2
        %v267 = vpop.permute.xlu0 %266
        %268 = vrot.lane.b32.xlu0 %v243, 2
        %v269 = vpop.permute.xlu0 %268
        %270 = vrot.lane.b32.xlu0 %v244, 2
        %v271 = vpop.permute.xlu0 %270
        %272 = vrot.lane.b32.xlu0 %v245, 2
        %v273 = vpop.permute.xlu0 %272
        %274 = vrot.lane.b32.xlu0 %v246, 2
        %v275 = vpop.permute.xlu0 %274
        %276 = vrot.lane.b32.xlu0 %v247, 2
        %v277 = vpop.permute.xlu0 %276
        %278 = vrot.lane.b32.xlu0 %v248, 2
        %v279 = vpop.permute.xlu0 %278
        %280 = vrot.lane.b32.xlu0 %v249, 2
        %v281 = vpop.permute.xlu0 %280
        %282 = vrot.lane.b32.xlu0 %v250, 2
        %v283 = vpop.permute.xlu0 %282
        %284 = vrot.lane.b32.xlu0 %v251, 2
        %v285 = vpop.permute.xlu0 %284
        %286 = vrot.lane.b32.xlu0 %v252, 2
        %v287 = vpop.permute.xlu0 %286
        %288 = vrot.lane.b32.xlu0 %v253, 2
        %v289 = vpop.permute.xlu0 %288
        %v302 = vsub.f32 %v242, %v267
        %v303 = vsub.f32 %v243, %v269
        %v304 = vsub.f32 %v244, %v271
        %v305 = vsub.f32 %v245, %v273
        %v306 = vsub.f32 %v246, %v275
        %v307 = vsub.f32 %v247, %v277
        %v308 = vsub.f32 %v248, %v279
        %v309 = vsub.f32 %v249, %v281
        %v310 = vsub.f32 %v250, %v283
        %v311 = vsub.f32 %v251, %v285
        %v312 = vsub.f32 %v252, %v287
        %v313 = vsub.f32 %v253, %v289
        %v314 = vmul.f32 %v242, 2.0
        %v315 = vmul.f32 %v243, 2.0
        %v316 = vmul.f32 %v244, 2.0
        %v317 = vmul.f32 %v245, 2.0
        %v318 = vmul.f32 %v246, 2.0
        %v319 = vmul.f32 %v247, 2.0
        %v320 = vmul.f32 %v248, 2.0
        %v321 = vmul.f32 %v249, 2.0
        %v322 = vmul.f32 %v250, 2.0
        %v323 = vmul.f32 %v251, 2.0
        %v324 = vmul.f32 %v252, 2.0
        %v325 = vmul.f32 %v253, 2.0
        %338 = vrot.lane.b32.xlu0 %v314, 127
        %v339 = vpop.permute.xlu0 %338
        %340 = vrot.lane.b32.xlu0 %v315, 127
        %v341 = vpop.permute.xlu0 %340
        %342 = vrot.lane.b32.xlu0 %v316, 127
        %v343 = vpop.permute.xlu0 %342
        %344 = vrot.lane.b32.xlu0 %v317, 127
        %v345 = vpop.permute.xlu0 %344
        %346 = vrot.lane.b32.xlu0 %v318, 127
        %v347 = vpop.permute.xlu0 %346
        %348 = vrot.lane.b32.xlu0 %v319, 127
        %v349 = vpop.permute.xlu0 %348
        %350 = vrot.lane.b32.xlu0 %v320, 127
        %v351 = vpop.permute.xlu0 %350
        %352 = vrot.lane.b32.xlu0 %v321, 127
        %v353 = vpop.permute.xlu0 %352
        %354 = vrot.lane.b32.xlu0 %v322, 127
        %v355 = vpop.permute.xlu0 %354
        %356 = vrot.lane.b32.xlu0 %v323, 127
        %v357 = vpop.permute.xlu0 %356
        %358 = vrot.lane.b32.xlu0 %v324, 127
        %v359 = vpop.permute.xlu0 %358
        %360 = vrot.lane.b32.xlu0 %v325, 127
        %v361 = vpop.permute.xlu0 %360
        %v374 = vadd.f32 %v242, %v339
        %v375 = vadd.f32 %v243, %v341
        %v376 = vadd.f32 %v244, %v343
        %v377 = vadd.f32 %v245, %v345
        %v378 = vadd.f32 %v246, %v347
        %v379 = vadd.f32 %v247, %v349
        %v380 = vadd.f32 %v248, %v351
        %v381 = vadd.f32 %v249, %v353
        %v382 = vadd.f32 %v250, %v355
        %v383 = vadd.f32 %v251, %v357
        %v384 = vadd.f32 %v252, %v359
        %v385 = vadd.f32 %v253, %v361
        %386 = vrot.lane.b32.xlu0 %v242, 126
        %v387 = vpop.permute.xlu0 %386
        %388 = vrot.lane.b32.xlu0 %v243, 126
        %v389 = vpop.permute.xlu0 %388
        %390 = vrot.lane.b32.xlu0 %v244, 126
        %v391 = vpop.permute.xlu0 %390
        %392 = vrot.lane.b32.xlu0 %v245, 126
        %v393 = vpop.permute.xlu0 %392
        %394 = vrot.lane.b32.xlu0 %v246, 126
        %v395 = vpop.permute.xlu0 %394
        %396 = vrot.lane.b32.xlu0 %v247, 126
        %v397 = vpop.permute.xlu0 %396
        %398 = vrot.lane.b32.xlu0 %v248, 126
        %v399 = vpop.permute.xlu0 %398
        %400 = vrot.lane.b32.xlu0 %v249, 126
        %v401 = vpop.permute.xlu0 %400
        %402 = vrot.lane.b32.xlu0 %v250, 126
        %v403 = vpop.permute.xlu0 %402
        %404 = vrot.lane.b32.xlu0 %v251, 126
        %v405 = vpop.permute.xlu0 %404
        %406 = vrot.lane.b32.xlu0 %v252, 126
        %v407 = vpop.permute.xlu0 %406
        %408 = vrot.lane.b32.xlu0 %v253, 126
        %v409 = vpop.permute.xlu0 %408
        %v422 = vadd.f32 %v374, %v387
        %v423 = vadd.f32 %v375, %v389
        %v424 = vadd.f32 %v376, %v391
        %v425 = vadd.f32 %v377, %v393
        %v426 = vadd.f32 %v378, %v395
        %v427 = vadd.f32 %v379, %v397
        %v428 = vadd.f32 %v380, %v399
        %v429 = vadd.f32 %v381, %v401
        %v430 = vadd.f32 %v382, %v403
        %v431 = vadd.f32 %v383, %v405
        %v432 = vadd.f32 %v384, %v407
        %v433 = vadd.f32 %v385, %v409
        %v434 = vmul.f32 %v302, 2.0
        %v435 = vmul.f32 %v303, 2.0
        %v436 = vmul.f32 %v304, 2.0
        %v437 = vmul.f32 %v305, 2.0
        %v438 = vmul.f32 %v306, 2.0
        %v439 = vmul.f32 %v307, 2.0
        %v440 = vmul.f32 %v308, 2.0
        %v441 = vmul.f32 %v309, 2.0
        %v442 = vmul.f32 %v310, 2.0
        %v443 = vmul.f32 %v311, 2.0
        %v444 = vmul.f32 %v312, 2.0
        %v445 = vmul.f32 %v313, 2.0
        %vm458 = vcmask 1046528
        %v459 = vrot.slane %v434, 1
        %v460 = vrot.slane %v435, 1
        %v461 = vsel %vm458, %v459, %v460
        %v462 = vrot.slane %v436, 1
        %v463 = vsel %vm458, %v460, %v462
        %v464 = vrot.slane %v437, 1
        %v465 = vrot.slane %v438, 1
        %v466 = vsel %vm458, %v464, %v465
        %v467 = vrot.slane %v439, 1
        %v468 = vsel %vm458, %v465, %v467
        %v469 = vrot.slane %v440, 1
        %v470 = vrot.slane %v441, 1
        %v471 = vsel %vm458, %v469, %v470
        %v472 = vrot.slane %v442, 1
        %v473 = vsel %vm458, %v470, %v472
        %v474 = vrot.slane %v443, 1
        %v475 = vrot.slane %v444, 1
        %v476 = vsel %vm458, %v474, %v475
        %v477 = vrot.slane %v445, 1
        %v478 = vsel %vm458, %v475, %v477
        %v487 = vadd.f32 %v302, %v461
        %v488 = vadd.f32 %v303, %v463
        %v489 = vadd.f32 %v305, %v466
        %v490 = vadd.f32 %v306, %v468
        %v491 = vadd.f32 %v308, %v471
        %v492 = vadd.f32 %v309, %v473
        %v493 = vadd.f32 %v311, %v476
        %v494 = vadd.f32 %v312, %v478
        %vm507 = vcmask 1045504
        %v508 = vrot.slane %v302, 2
        %v509 = vrot.slane %v303, 2
        %v510 = vsel %vm507, %v508, %v509
        %v511 = vrot.slane %v304, 2
        %v512 = vsel %vm507, %v509, %v511
        %v513 = vrot.slane %v305, 2
        %v514 = vrot.slane %v306, 2
        %v515 = vsel %vm507, %v513, %v514
        %v516 = vrot.slane %v307, 2
        %v517 = vsel %vm507, %v514, %v516
        %v518 = vrot.slane %v308, 2
        %v519 = vrot.slane %v309, 2
        %v520 = vsel %vm507, %v518, %v519
        %v521 = vrot.slane %v310, 2
        %v522 = vsel %vm507, %v519, %v521
        %v523 = vrot.slane %v311, 2
        %v524 = vrot.slane %v312, 2
        %v525 = vsel %vm507, %v523, %v524
        %v526 = vrot.slane %v313, 2
        %v527 = vsel %vm507, %v524, %v526
        %v536 = vadd.f32 %v487, %v510
        %v537 = vadd.f32 %v488, %v512
        %v538 = vadd.f32 %v489, %v515
        %v539 = vadd.f32 %v490, %v517
        %v540 = vadd.f32 %v491, %v520
        %v541 = vadd.f32 %v492, %v522
        %v542 = vadd.f32 %v493, %v525
        %v543 = vadd.f32 %v494, %v527
        %552 = vrot.lane.b32.xlu0 %v536, 126
        %v553 = vpop.permute.xlu0 %552
        %554 = vrot.lane.b32.xlu0 %v537, 126
        %v555 = vpop.permute.xlu0 %554
        %556 = vrot.lane.b32.xlu0 %v538, 126
        %v557 = vpop.permute.xlu0 %556
        %558 = vrot.lane.b32.xlu0 %v539, 126
        %v559 = vpop.permute.xlu0 %558
        %560 = vrot.lane.b32.xlu0 %v540, 126
        %v561 = vpop.permute.xlu0 %560
        %562 = vrot.lane.b32.xlu0 %v541, 126
        %v563 = vpop.permute.xlu0 %562
        %564 = vrot.lane.b32.xlu0 %v542, 126
        %v565 = vpop.permute.xlu0 %564
        %566 = vrot.lane.b32.xlu0 %v543, 126
        %v567 = vpop.permute.xlu0 %566
        %vm576 = vcmask 130048
        %577 = vst.msk [vmem:[%s168] sm:$0xff] %vm576, %v553
        %578 = vst.msk [vmem:[%s168 + $0x8] sm:$0xff] %vm576, %v555
        %579 = vst.msk [vmem:[%s168 + $0x10] sm:$0xff] %vm576, %v557
        %580 = vst.msk [vmem:[%s168 + $0x18] sm:$0xff] %vm576, %v559
        %581 = vst.msk [vmem:[%s168 + $0x20] sm:$0xff] %vm576, %v561
        %582 = vst.msk [vmem:[%s168 + $0x28] sm:$0xff] %vm576, %v563
        %583 = vst.msk [vmem:[%s168 + $0x30] sm:$0xff] %vm576, %v565
        %584 = vst.msk [vmem:[%s168 + $0x38] sm:$0xff] %vm576, %v567
        %vm593 = vcmask 1041408
        %v594 = vrot.slane %v422, 6
        %v595 = vrot.slane %v423, 6
        %v596 = vsel %vm593, %v594, %v595
        %v597 = vrot.slane %v425, 6
        %v598 = vrot.slane %v426, 6
        %v599 = vsel %vm593, %v597, %v598
        %v600 = vrot.slane %v428, 6
        %v601 = vrot.slane %v429, 6
        %v602 = vsel %vm593, %v600, %v601
        %v603 = vrot.slane %v431, 6
        %v604 = vrot.slane %v432, 6
        %v605 = vsel %vm593, %v603, %v604
        %v618 = vsub.f32 %v422, %v594
        %v619 = vsub.f32 %v423, %v596
        %v620 = vsub.f32 %v424, %v595
        %v621 = vsub.f32 %v425, %v597
        %v622 = vsub.f32 %v426, %v599
        %v623 = vsub.f32 %v427, %v598
        %v624 = vsub.f32 %v428, %v600
        %v625 = vsub.f32 %v429, %v602
        %v626 = vsub.f32 %v430, %v601
        %v627 = vsub.f32 %v431, %v603
        %v628 = vsub.f32 %v432, %v605
        %v629 = vsub.f32 %v433, %v604
        %vm630 = vcmask 130050
        %631 = vst.msk [vmem:[%s175 - $0x2] sm:$0xfc] %vm630, %v618
        %632 = vst.msk [vmem:[%s175 + $0x6] sm:$0xff] %vm576, %v619
        %vm633 = vcmask 123904
        %634 = vst.msk [vmem:[%s175 + $0xe] sm:$0x3] %vm633, %v620
        %635 = vst.msk [vmem:[%s175 + $0xe] sm:$0xfc] %vm630, %v621
        %636 = vst.msk [vmem:[%s175 + $0x16] sm:$0xff] %vm576, %v622
        %637 = vst.msk [vmem:[%s175 + $0x1e] sm:$0x3] %vm633, %v623
        %638 = vst.msk [vmem:[%s175 + $0x1e] sm:$0xfc] %vm630, %v624
        %639 = vst.msk [vmem:[%s175 + $0x26] sm:$0xff] %vm576, %v625
        %640 = vst.msk [vmem:[%s175 + $0x2e] sm:$0x3] %vm633, %v626
        %641 = vst.msk [vmem:[%s175 + $0x2e] sm:$0xfc] %vm630, %v627
        %642 = vst.msk [vmem:[%s175 + $0x36] sm:$0xff] %vm576, %v628
        %643 = vst.msk [vmem:[%s175 + $0x3e] sm:$0x3] %vm633, %v629
        %s644 = sand.u32 %s57, 1
        %s645 = scalar_lea.sflag [#allocation5], %s644
        %s646 = sand.u32 %s57, 1
        %s647 = smul.addr %s646, 64
        %s648 = scalar_lea.vmem [#allocation6], %s647
        %s649 = sand.u32 %s83, 1
        %s650 = scalar_lea.sflag [#allocation8], %s649
        %s651 = sand.u32 %s83, 1
        %s652 = smul.addr %s651, 64
        %s653 = scalar_lea.vmem [#allocation7], %s652
        // Predicated region
        $region29: #{tpu_custom_call.1} parent=23 // pred_check
          %p654 = pneg %p67
        $region30: #{tpu_custom_call.1} parent=23 // pred_check_branch
          %656 = sbr.rel (%p654) target = $region32
        $region31: #{tpu_custom_call.1} parent=23 // pred_region
          %s657 = smul.u32 4, %s23
          %659 = vsyncadd %s645, 0
          %s660 = smul.addr %s657, 2
          %s661 = smul.addr %s660, 8
          %s662 = scalar_lea.hbm %s1, %s661
          %s663 = sshll.u32 %s648, 4
          %s664 = int_to_ptr.vmem [resolvable:$true] %s663
          %s665 = sshll.u32 %s662, 4
          %s666 = int_to_ptr.hbm [resolvable:$true] %s665
          %671 = dma.vmem_to_hbm [thread:$0]  %s664, 1024, %s666, %s645, 128, 128, 8
        $region32: #{tpu_custom_call.1} parent=23 // pred_fallthru
          _
        // Predicated region
        $region33: #{tpu_custom_call.1} parent=23 // pred_check
          %p672 = pneg %p93
        $region34: #{tpu_custom_call.1} parent=23 // pred_check_branch
          %674 = sbr.rel (%p672) target = $region36
        $region35: #{tpu_custom_call.1} parent=23 // pred_region
          %s675 = smul.u32 4, %s23
          %677 = vsyncadd %s650, 0
          %s678 = smul.addr %s675, 2
          %s679 = smul.addr %s678, 8
          %s680 = scalar_lea.hbm %s2, %s679
          %s681 = sshll.u32 %s653, 4
          %s682 = int_to_ptr.vmem [resolvable:$true] %s681
          %s683 = sshll.u32 %s680, 4
          %s684 = int_to_ptr.hbm [resolvable:$true] %s683
          %689 = dma.vmem_to_hbm [thread:$0]  %s682, 1024, %s684, %s650, 128, 128, 8
        $region36: #{tpu_custom_call.1} parent=23 // pred_fallthru
          _
      $region24: #{tpu_custom_call.1} parent=5 // pred_fallthru
        _
      %p690 = scmp.le.s32.totalorder 2, %s18
      // Predicated region
      $region37: #{tpu_custom_call.1} parent=5 // pred_check
        %p691 = pneg %p690
      $region38: #{tpu_custom_call.1} parent=5 // pred_check_branch
        %693 = sbr.rel (%p691) target = $region40
      $region39: #{tpu_custom_call.1} parent=5 // pred_region
        %s694 = ssub.s32 %s18, 2
        // Predicated region
        $region41: #{tpu_custom_call.1} parent=39 // pred_check
          %p695 = pneg %p73
        $region42: #{tpu_custom_call.1} parent=39 // pred_check_branch
          %697 = sbr.rel (%p695) target = $region44
        $region43: #{tpu_custom_call.1} parent=39 // pred_region
          %s698 = sand.u32 %s58, 1
          %s699 = scalar_lea.sflag [#allocation5], %s698
          %s700 = sand.u32 %s58, 1
          %s701 = smul.addr %s700, 64
          %s702 = scalar_lea.vmem [#allocation6], %s701
          %704 = dma.done %s699, 1024
        $region44: #{tpu_custom_call.1} parent=39 // pred_fallthru
          _
        // Predicated region
        $region45: #{tpu_custom_call.1} parent=39 // pred_check
          %p705 = pneg %p99
        $region46: #{tpu_custom_call.1} parent=39 // pred_check_branch
          %707 = sbr.rel (%p705) target = $region48
        $region47: #{tpu_custom_call.1} parent=39 // pred_region
          %s708 = sand.u32 %s84, 1
          %s709 = scalar_lea.sflag [#allocation8], %s708
          %s710 = sand.u32 %s84, 1
          %s711 = smul.addr %s710, 64
          %s712 = scalar_lea.vmem [#allocation7], %s711
          %714 = dma.done %s709, 1024
        $region48: #{tpu_custom_call.1} parent=39 // pred_fallthru
          _
      $region40: #{tpu_custom_call.1} parent=5 // pred_fallthru
        _
    $region6: #{tpu_custom_call.1} parent=1 // loop_footer
      %s22 = sadd.s32 1, %s18
    $region7: #{tpu_custom_call.1} parent=1 // loop_footer_branch
      %17 = sbr.rel target = $region3
    $region8: #{tpu_custom_call.1} parent=1 // loop_exit
      _
    %715 = vsyncpa [#allocation4], 1
    %s716 = scalar_lea.sflag [#allocation4], 1
    %717 = vsyncpa %s716, 1
    %718 = vsyncpa [#allocation5], 1
    %s719 = scalar_lea.sflag [#allocation5], 1
    %720 = vsyncpa %s719, 1
    %721 = vsyncpa [#allocation8], 1
    %s722 = scalar_lea.sflag [#allocation8], 1
    %723 = vsyncpa %s722, 1

</llo_original>
